<compile_context>
chip_gen: v7x
topology: tpu7x:2x2x1
jax: 0.10.0
libtpu: 0.0.40
codegen_flags: <defaults>
</compile_context>

<pallas_src>
import jax
import jax.numpy as jnp
import numpy as np
from jax.experimental import pallas as pl
from jax.experimental.pallas import tpu as pltpu

LN_EPS = 1e-5  # PyTorch nn.LayerNorm default


def _layernorm_over_rows(v, gamma_col, beta_col):
    """LayerNorm over axis 0 (the C / sublane axis) of v: (C, T)."""
    mu = jnp.mean(v, axis=0, keepdims=True)               # (1, T)
    d = v - mu
    var = jnp.mean(d * d, axis=0, keepdims=True)          # (1, T)
    return d * jax.lax.rsqrt(var + LN_EPS) * gamma_col + beta_col


def _make_kernel(C, T, H, mid, batch_block):
    # Column layout of the packed (C, 4*mid + 9) weight slab (see pack_params).
    J_W2 = 0                       # (C, mid)   conv_seq 2nd conv weight
    J_W3T = mid                    # (C, mid)   conv_feat 1st conv weight^T
    J_B3 = 2 * mid                 # (C, mid)   b3 broadcast over rows (use row 0)
    J_W4 = 3 * mid                 # (C, mid)   w4 broadcast over rows (use row 0)
    J_W1 = 4 * mid                 # (C, 1)     w1 in rows 0..mid-1
    J_B1 = J_W1 + 1                # (C, 1)     b1 in rows 0..mid-1
    J_B2 = J_W1 + 2
    J_B4 = J_W1 + 3
    J_LN1G, J_LN1B = J_W1 + 4, J_W1 + 5
    J_LN2G, J_LN2B = J_W1 + 6, J_W1 + 7
    J_FB2 = J_W1 + 8

    def kernel(x_ref, pc_ref, pf1_ref, wf2_ref, o_ref):
        # Shared weights: constant block index across the grid -> fetched once,
        # loaded/sliced once per grid step (outside the batch-block loop).
        w2 = pc_ref[:, J_W2:J_W2 + mid]                     # (C, mid)
        w3t = pc_ref[:, J_W3T:J_W3T + mid]                  # (C, mid)
        b3_row = pc_ref[0:1, J_B3:J_B3 + mid]               # (1, mid)
        w4_row = pc_ref[0:1, J_W4:J_W4 + mid]               # (1, mid)
        w1_col = pc_ref[0:mid, J_W1:J_W1 + 1]               # (mid, 1)
        b1_col = pc_ref[0:mid, J_B1:J_B1 + 1]               # (mid, 1)
        b2_c = pc_ref[:, J_B2:J_B2 + 1]                     # (C, 1)
        b4 = pc_ref[0:1, J_B4:J_B4 + 1]                     # (1, 1)
        g1_c = pc_ref[:, J_LN1G:J_LN1G + 1]
        be1_c = pc_ref[:, J_LN1B:J_LN1B + 1]
        g2_c = pc_ref[:, J_LN2G:J_LN2G + 1]
        be2_c = pc_ref[:, J_LN2B:J_LN2B + 1]
        fb2_c = pc_ref[:, J_FB2:J_FB2 + 1]
        wf1 = pf1_ref[:, 0:C]                               # (H, C)
        fb1_c = pf1_ref[:, C:C + 1]                         # (H, 1)
        wf2 = wf2_ref[...]                                  # (C, H)

        for bb in range(batch_block):                       # static unroll
            x = x_ref[bb]                                   # (C, T) f32

            # ---------------- CoordinateAttention ----------------
            # sequence branch: mean over channels, 1x1 convs -> broadcast MAC + MXU dot
            xm_t = jnp.mean(x, axis=0, keepdims=True)                       # (1, T)
            h1 = jnp.maximum(w1_col * xm_t + b1_col, 0.0)                   # (mid, T)
            s = jax.nn.sigmoid(
                jnp.dot(w2, h1, preferred_element_type=jnp.float32) + b2_c)  # (C, T)

            # feature branch: mean over time, 1x1 convs -> sublane + lane reduces
            xm_c = jnp.mean(x, axis=1, keepdims=True)                       # (C, 1)
            t_row = jnp.sum(w3t * xm_c, axis=0, keepdims=True)              # (1, mid)
            h2 = jnp.maximum(t_row + b3_row, 0.0)                           # (1, mid)
            f = jax.nn.sigmoid(
                jnp.sum(w4_row * h2, axis=1, keepdims=True) + b4)           # (1, 1)

            att = jax.nn.sigmoid(s + f)
            attn_out = x * att                                              # (C, T)

            # ---------------- norm1(x + attn_out) ----------------
            y = _layernorm_over_rows(x + attn_out, g1_c, be1_c)             # (C, T)

            # ---------------- FFN (MXU matmuls) ----------------
            h = jnp.maximum(
                jnp.dot(wf1, y, preferred_element_type=jnp.float32) + fb1_c,
                0.0)                                                        # (H, T)
            ffn = jnp.dot(wf2, h, preferred_element_type=jnp.float32) + fb2_c

            # ---------------- norm2(y + ffn) ----------------
            o_ref[bb] = _layernorm_over_rows(y + ffn, g2_c, be2_c).astype(o_ref.dtype)

    return kernel


def pack_params(p):
    """Pack the 16 module tensors into 3 kernel operands."""
    C = p["ca_b2"].shape[0]
    mid = p["ca_w1"].shape[0]

    def bcast_row(v):   # length-mid vector broadcast over C rows -> (C, mid)
        return jnp.broadcast_to(v.astype(jnp.float32)[None, :], (C, mid))

    def padcol(v):      # length-mid vector into a (C, 1) column (rows 0..mid-1)
        out = jnp.zeros((C,), jnp.float32).at[:mid].set(v.astype(jnp.float32))
        return out[:, None]

    pack_c = jnp.concatenate([
        p["ca_w2"].astype(jnp.float32),              # (C, mid)  W2
        p["ca_w3"].T.astype(jnp.float32),            # (C, mid)  W3^T
        bcast_row(p["ca_b3"]),                       # (C, mid)  b3 (row 0 used)
        bcast_row(p["ca_w4"]),                       # (C, mid)  w4 (row 0 used)
        padcol(p["ca_w1"]),                          # (C, 1)    w1
        padcol(p["ca_b1"]),                          # (C, 1)    b1
        p["ca_b2"].astype(jnp.float32)[:, None],     # (C, 1)    b2
        jnp.full((C, 1), p["ca_b4"], jnp.float32),   # (C, 1)    b4
        p["ln1_g"].astype(jnp.float32)[:, None],
        p["ln1_b"].astype(jnp.float32)[:, None],
        p["ln2_g"].astype(jnp.float32)[:, None],
        p["ln2_b"].astype(jnp.float32)[:, None],
        p["ffn_b2"].astype(jnp.float32)[:, None],
    ], axis=1)                                       # (C, 4*mid + 9)

    pack_f1 = jnp.concatenate(
        [p["ffn_w1"], p["ffn_b1"][:, None]], axis=1).astype(jnp.float32)  # (H, C+1)
    return pack_c, pack_f1, p["ffn_w2"].astype(jnp.float32)


def transformer_block(x, params, *, batch_block=1):
    """x: (B, C, T) f32 with C == embed_dim. Returns (B, C, T), matching the
    PyTorch TransformerBlock.forward."""
    B, C, T = x.shape
    mid = params["ca_w1"].shape[0]
    H = params["ffn_w1"].shape[0]
    assert mid >= 1, "embed_dim must be >= reduction"
    assert B % batch_block == 0, "batch_block must divide B"

    pack_c, pack_f1, w_f2 = pack_params(params)
    kc = pack_c.shape[1]
    kernel = _make_kernel(C, T, H, mid, batch_block)

    # NOTE: for very large T the only cross-T coupling is the feature-branch mean
    # over T; at these sizes the whole (C, T) slab fits VMEM so T is kept whole.
    # TODO(synk): for huge T, hoist the time-mean and tile T with its own grid axis.
    return pl.pallas_call(
        kernel,
        out_shape=jax.ShapeDtypeStruct((B, C, T), x.dtype),
        grid=(B // batch_block,),
        in_specs=[
            pl.BlockSpec((batch_block, C, T), lambda b: (b, 0, 0)),  # x
            pl.BlockSpec((C, kc), lambda b: (0, 0)),                 # packed small weights
            pl.BlockSpec((H, C + 1), lambda b: (0, 0)),              # FFN W1 | b1
            pl.BlockSpec((C, H), lambda b: (0, 0)),                  # FFN W2
        ],
        out_specs=pl.BlockSpec((batch_block, C, T), lambda b: (b, 0, 0)),
        compiler_params=pltpu.CompilerParams(
            dimension_semantics=("parallel",)),
    )(x, pack_c, pack_f1, w_f2)


def init_params(key, embed_dim, reduction=8):
    C = embed_dim
    mid = C // reduction
    assert mid >= 1, "embed_dim must be >= reduction"
    H = 4 * C
    ks = jax.random.split(key, 12)

    def u(k, shape, fan_in):
        b = 1.0 / np.sqrt(max(fan_in, 1))
        return jax.random.uniform(k, shape, jnp.float32, -b, b)

    return {
        # CoordinateAttention
        "ca_w1": u(ks[0], (mid,), 1), "ca_b1": u(ks[1], (mid,), 1),
        "ca_w2": u(ks[2], (C, mid), mid), "ca_b2": u(ks[3], (C,), mid),
        "ca_w3": u(ks[4], (mid, C), C), "ca_b3": u(ks[5], (mid,), C),
        "ca_w4": u(ks[6], (mid,), mid), "ca_b4": u(ks[7], (), mid),
        # LayerNorm 1
        "ln1_g": jnp.ones((C,), jnp.float32), "ln1_b": jnp.zeros((C,), jnp.float32),
        # FFN (torch Linear layout: (out, in))
        "ffn_w1": u(ks[8], (H, C), C), "ffn_b1": u(ks[9], (H,), C),
        "ffn_w2": u(ks[10], (C, H), H), "ffn_b2": u(ks[11], (C,), H),
        # LayerNorm 2
        "ln2_g": jnp.ones((C,), jnp.float32), "ln2_b": jnp.zeros((C,), jnp.float32),
    }


def reference(x, p):
    """Pure-JAX reference matching the PyTorch TransformerBlock.forward."""
    hi = jax.lax.Precision.HIGHEST
    # CoordinateAttention on (B, C, T)
    xm_t = jnp.mean(x, axis=1, keepdims=True)                               # (B,1,T)
    h1 = jax.nn.relu(p["ca_w1"][None, :, None] * xm_t + p["ca_b1"][None, :, None])
    s = jax.nn.sigmoid(jnp.einsum("cm,bmt->bct", p["ca_w2"], h1, precision=hi)
                       + p["ca_b2"][None, :, None])
    xm_c = jnp.mean(x, axis=2, keepdims=True)                               # (B,C,1)
    h2 = jax.nn.relu(jnp.einsum("mc,bcu->bmu", p["ca_w3"], xm_c, precision=hi)
                     + p["ca_b3"][None, :, None])
    f = jax.nn.sigmoid(jnp.einsum("m,bmu->bu", p["ca_w4"], h2,
                                  precision=hi)[:, None, :] + p["ca_b4"])   # (B,1,1)
    att = jax.nn.sigmoid(s + f)
    attn_out = x * att                                                      # (B,C,T)

    # rest of the block in (B, T, C)
    xt = jnp.swapaxes(x, 1, 2)
    at = jnp.swapaxes(attn_out, 1, 2)

    def ln(v, g, b):
        mu = jnp.mean(v, axis=-1, keepdims=True)
        var = jnp.mean((v - mu) ** 2, axis=-1, keepdims=True)
        return (v - mu) * jax.lax.rsqrt(var + LN_EPS) * g + b

    y = ln(xt + at, p["ln1_g"], p["ln1_b"])
    h = jax.nn.relu(jnp.einsum("btc,hc->bth", y, p["ffn_w1"], precision=hi)
                    + p["ffn_b1"])
    ffn = jnp.einsum("bth,ch->btc", h, p["ffn_w2"], precision=hi) + p["ffn_b2"]
    z = ln(y + ffn, p["ln2_g"], p["ln2_b"])
    return jnp.swapaxes(z, 1, 2)                                            # (B,C,T)


if __name__ == "__main__":
    B, embed_dim, T, reduction = 2, 16, 128, 8
    key = jax.random.PRNGKey(0)
    kx, kp = jax.random.split(key)
    x = jax.random.normal(kx, (B, embed_dim, T), jnp.float32)
    params = init_params(kp, embed_dim, reduction)

    out = transformer_block(x, params, batch_block=1)
    out = jax.block_until_ready(out)

    ref = reference(x, params)
    np.testing.assert_allclose(np.asarray(out), np.asarray(ref),
                               rtol=2e-3, atol=2e-3)
    print("KERNEL_OK")
</pallas_src>

<mosaic_0001>
module attributes {stable_mosaic.version = 11 : i64} {
  func.func @kernel(%arg0: i32, %arg1: memref<1x16x128xf32, #tpu.memory_space<vmem>>, %arg2: memref<16x17xf32, #tpu.memory_space<vmem>>, %arg3: memref<64x17xf32, #tpu.memory_space<vmem>>, %arg4: memref<16x64xf32, #tpu.memory_space<vmem>>, %arg5: memref<1x16x128xf32, #tpu.memory_space<vmem>>) attributes {dimension_semantics = [#tpu.dimension_semantics<parallel>], iteration_bounds = array<i64: 2>, scalar_prefetch = 0 : i64, scratch_operands = 0 : i64, tpu.core_type = #tpu.core_type<tc>, window_params = [{transform_indices = @transform_0, window_bounds = array<i64: 1, 16, 128>}, {pipeline_mode = #tpu.pipeline_mode<synchronous>, transform_indices = @transform_1, window_bounds = array<i64: 16, 17>}, {pipeline_mode = #tpu.pipeline_mode<synchronous>, transform_indices = @transform_2, window_bounds = array<i64: 64, 17>}, {pipeline_mode = #tpu.pipeline_mode<synchronous>, transform_indices = @transform_3, window_bounds = array<i64: 16, 64>}, {transform_indices = @transform_4, window_bounds = array<i64: 1, 16, 128>}]} {
    %c0 = arith.constant 0 : index
    %c0_0 = arith.constant 0 : index
    %0 = vector.load %arg2[%c0, %c0_0] : memref<16x17xf32, #tpu.memory_space<vmem>>, vector<16x2xf32>
    %c0_1 = arith.constant 0 : index
    %c2 = arith.constant 2 : index
    %1 = vector.load %arg2[%c0_1, %c2] : memref<16x17xf32, #tpu.memory_space<vmem>>, vector<16x2xf32>
    %c0_2 = arith.constant 0 : index
    %c4 = arith.constant 4 : index
    %2 = vector.load %arg2[%c0_2, %c4] : memref<16x17xf32, #tpu.memory_space<vmem>>, vector<1x2xf32>
    %c0_3 = arith.constant 0 : index
    %c6 = arith.constant 6 : index
    %3 = vector.load %arg2[%c0_3, %c6] : memref<16x17xf32, #tpu.memory_space<vmem>>, vector<1x2xf32>
    %c0_4 = arith.constant 0 : index
    %c8 = arith.constant 8 : index
    %4 = vector.load %arg2[%c0_4, %c8] : memref<16x17xf32, #tpu.memory_space<vmem>>, vector<2x1xf32>
    %c0_5 = arith.constant 0 : index
    %c9 = arith.constant 9 : index
    %5 = vector.load %arg2[%c0_5, %c9] : memref<16x17xf32, #tpu.memory_space<vmem>>, vector<2x1xf32>
    %c0_6 = arith.constant 0 : index
    %c10 = arith.constant 10 : index
    %6 = vector.load %arg2[%c0_6, %c10] : memref<16x17xf32, #tpu.memory_space<vmem>>, vector<16x1xf32>
    %c0_7 = arith.constant 0 : index
    %c11 = arith.constant 11 : index
    %7 = vector.load %arg2[%c0_7, %c11] : memref<16x17xf32, #tpu.memory_space<vmem>>, vector<1x1xf32>
    %c0_8 = arith.constant 0 : index
    %c12 = arith.constant 12 : index
    %8 = vector.load %arg2[%c0_8, %c12] : memref<16x17xf32, #tpu.memory_space<vmem>>, vector<16x1xf32>
    %c0_9 = arith.constant 0 : index
    %c13 = arith.constant 13 : index
    %9 = vector.load %arg2[%c0_9, %c13] : memref<16x17xf32, #tpu.memory_space<vmem>>, vector<16x1xf32>
    %c0_10 = arith.constant 0 : index
    %c14 = arith.constant 14 : index
    %10 = vector.load %arg2[%c0_10, %c14] : memref<16x17xf32, #tpu.memory_space<vmem>>, vector<16x1xf32>
    %c0_11 = arith.constant 0 : index
    %c15 = arith.constant 15 : index
    %11 = vector.load %arg2[%c0_11, %c15] : memref<16x17xf32, #tpu.memory_space<vmem>>, vector<16x1xf32>
    %c0_12 = arith.constant 0 : index
    %c16 = arith.constant 16 : index
    %12 = vector.load %arg2[%c0_12, %c16] : memref<16x17xf32, #tpu.memory_space<vmem>>, vector<16x1xf32>
    %c0_13 = arith.constant 0 : index
    %c0_14 = arith.constant 0 : index
    %13 = vector.load %arg3[%c0_13, %c0_14] : memref<64x17xf32, #tpu.memory_space<vmem>>, vector<64x16xf32>
    %c0_15 = arith.constant 0 : index
    %c16_16 = arith.constant 16 : index
    %14 = vector.load %arg3[%c0_15, %c16_16] : memref<64x17xf32, #tpu.memory_space<vmem>>, vector<64x1xf32>
    %c0_17 = arith.constant 0 : index
    %c0_18 = arith.constant 0 : index
    %15 = vector.load %arg4[%c0_17, %c0_18] : memref<16x64xf32, #tpu.memory_space<vmem>>, vector<16x64xf32>
    %c0_19 = arith.constant 0 : index
    %c0_20 = arith.constant 0 : index
    %c0_21 = arith.constant 0 : index
    %16 = vector.load %arg1[%c0_19, %c0_20, %c0_21] : memref<1x16x128xf32, #tpu.memory_space<vmem>>, vector<1x16x128xf32>
    %17 = vector.shape_cast %16 : vector<1x16x128xf32> to vector<16x128xf32>
    %cst = arith.constant dense<0.000000e+00> : vector<128xf32>
    %18 = vector.multi_reduction <add>, %17, %cst [0] : vector<16x128xf32> to vector<128xf32>
    %19 = vector.shape_cast %18 : vector<128xf32> to vector<1x128xf32>
    %cst_22 = arith.constant 1.600000e+01 : f32
    %20 = vector.broadcast %cst_22 : f32 to vector<1x128xf32>
    %21 = arith.divf %19, %20 : vector<1x128xf32>
    %22 = vector.broadcast %4 : vector<2x1xf32> to vector<2x128xf32>
    %23 = vector.broadcast %21 : vector<1x128xf32> to vector<2x128xf32>
    %24 = arith.mulf %22, %23 : vector<2x128xf32>
    %25 = vector.broadcast %5 : vector<2x1xf32> to vector<2x128xf32>
    %26 = arith.addf %24, %25 : vector<2x128xf32>
    %cst_23 = arith.constant 0.000000e+00 : f32
    %27 = vector.broadcast %cst_23 : f32 to vector<2x128xf32>
    %28 = arith.maximumf %26, %27 : vector<2x128xf32>
    %cst_24 = arith.constant dense<0.000000e+00> : vector<16x128xf32>
    %29 = tpu.matmul %0, %28, %cst_24 {dimension_numbers = #tpu.dot_dimension_numbers<[1], [0], [0], [1], [0, 0, 1, 1], [], []>} : vector<16x2xf32>, vector<2x128xf32>, vector<16x128xf32> -> vector<16x128xf32>
    %30 = vector.broadcast %6 : vector<16x1xf32> to vector<16x128xf32>
    %31 = arith.addf %29, %30 : vector<16x128xf32>
    %32 = arith.negf %31 : vector<16x128xf32>
    %33 = math.exp %32 : vector<16x128xf32>
    %cst_25 = arith.constant 1.000000e+00 : f32
    %34 = vector.broadcast %cst_25 : f32 to vector<16x128xf32>
    %35 = arith.addf %34, %33 : vector<16x128xf32>
    %36 = arith.divf %34, %35 : vector<16x128xf32>
    %cst_26 = arith.constant dense<0.000000e+00> : vector<16xf32>
    %37 = vector.multi_reduction <add>, %17, %cst_26 [1] : vector<16x128xf32> to vector<16xf32>
    %38 = vector.shape_cast %37 : vector<16xf32> to vector<16x1xf32>
    %cst_27 = arith.constant 1.280000e+02 : f32
    %39 = vector.broadcast %cst_27 : f32 to vector<16x1xf32>
    %40 = arith.divf %38, %39 : vector<16x1xf32>
    %41 = vector.broadcast %40 : vector<16x1xf32> to vector<16x2xf32>
    %42 = arith.mulf %1, %41 : vector<16x2xf32>
    %cst_28 = arith.constant dense<0.000000e+00> : vector<2xf32>
    %43 = vector.multi_reduction <add>, %42, %cst_28 [0] : vector<16x2xf32> to vector<2xf32>
    %44 = vector.shape_cast %43 : vector<2xf32> to vector<1x2xf32>
    %45 = arith.addf %44, %2 : vector<1x2xf32>
    %cst_29 = arith.constant 0.000000e+00 : f32
    %46 = vector.broadcast %cst_29 : f32 to vector<1x2xf32>
    %47 = arith.maximumf %45, %46 : vector<1x2xf32>
    %48 = arith.mulf %3, %47 : vector<1x2xf32>
    %cst_30 = arith.constant dense<0.000000e+00> : vector<1xf32>
    %49 = vector.multi_reduction <add>, %48, %cst_30 [1] : vector<1x2xf32> to vector<1xf32>
    %50 = vector.shape_cast %49 : vector<1xf32> to vector<1x1xf32>
    %51 = arith.addf %50, %7 : vector<1x1xf32>
    %52 = arith.negf %51 : vector<1x1xf32>
    %53 = math.exp %52 : vector<1x1xf32>
    %cst_31 = arith.constant 1.000000e+00 : f32
    %54 = vector.broadcast %cst_31 : f32 to vector<1x1xf32>
    %55 = arith.addf %54, %53 : vector<1x1xf32>
    %56 = arith.divf %54, %55 : vector<1x1xf32>
    %57 = vector.broadcast %56 : vector<1x1xf32> to vector<16x128xf32>
    %58 = arith.addf %36, %57 : vector<16x128xf32>
    %59 = arith.negf %58 : vector<16x128xf32>
    %60 = math.exp %59 : vector<16x128xf32>
    %cst_32 = arith.constant 1.000000e+00 : f32
    %61 = vector.broadcast %cst_32 : f32 to vector<16x128xf32>
    %62 = arith.addf %61, %60 : vector<16x128xf32>
    %63 = arith.divf %61, %62 : vector<16x128xf32>
    %64 = arith.mulf %17, %63 : vector<16x128xf32>
    %65 = arith.addf %17, %64 : vector<16x128xf32>
    %cst_33 = arith.constant dense<0.000000e+00> : vector<128xf32>
    %66 = vector.multi_reduction <add>, %65, %cst_33 [0] : vector<16x128xf32> to vector<128xf32>
    %67 = vector.shape_cast %66 : vector<128xf32> to vector<1x128xf32>
    %cst_34 = arith.constant 1.600000e+01 : f32
    %68 = vector.broadcast %cst_34 : f32 to vector<1x128xf32>
    %69 = arith.divf %67, %68 : vector<1x128xf32>
    %70 = vector.broadcast %69 : vector<1x128xf32> to vector<16x128xf32>
    %71 = arith.subf %65, %70 : vector<16x128xf32>
    %72 = arith.mulf %71, %71 : vector<16x128xf32>
    %cst_35 = arith.constant dense<0.000000e+00> : vector<128xf32>
    %73 = vector.multi_reduction <add>, %72, %cst_35 [0] : vector<16x128xf32> to vector<128xf32>
    %74 = vector.shape_cast %73 : vector<128xf32> to vector<1x128xf32>
    %cst_36 = arith.constant 1.600000e+01 : f32
    %75 = vector.broadcast %cst_36 : f32 to vector<1x128xf32>
    %76 = arith.divf %74, %75 : vector<1x128xf32>
    %cst_37 = arith.constant 9.99999974E-6 : f32
    %77 = vector.broadcast %cst_37 : f32 to vector<1x128xf32>
    %78 = arith.addf %76, %77 : vector<1x128xf32>
    %79 = math.rsqrt %78 : vector<1x128xf32>
    %80 = vector.broadcast %79 : vector<1x128xf32> to vector<16x128xf32>
    %81 = arith.mulf %71, %80 : vector<16x128xf32>
    %82 = vector.broadcast %8 : vector<16x1xf32> to vector<16x128xf32>
    %83 = arith.mulf %81, %82 : vector<16x128xf32>
    %84 = vector.broadcast %9 : vector<16x1xf32> to vector<16x128xf32>
    %85 = arith.addf %83, %84 : vector<16x128xf32>
    %cst_38 = arith.constant dense<0.000000e+00> : vector<64x128xf32>
    %86 = tpu.matmul %13, %85, %cst_38 {dimension_numbers = #tpu.dot_dimension_numbers<[1], [0], [0], [1], [0, 0, 1, 1], [], []>} : vector<64x16xf32>, vector<16x128xf32>, vector<64x128xf32> -> vector<64x128xf32>
    %87 = vector.broadcast %14 : vector<64x1xf32> to vector<64x128xf32>
    %88 = arith.addf %86, %87 : vector<64x128xf32>
    %cst_39 = arith.constant 0.000000e+00 : f32
    %89 = vector.broadcast %cst_39 : f32 to vector<64x128xf32>
    %90 = arith.maximumf %88, %89 : vector<64x128xf32>
    %cst_40 = arith.constant dense<0.000000e+00> : vector<16x128xf32>
    %91 = tpu.matmul %15, %90, %cst_40 {dimension_numbers = #tpu.dot_dimension_numbers<[1], [0], [0], [1], [0, 0, 1, 1], [], []>} : vector<16x64xf32>, vector<64x128xf32>, vector<16x128xf32> -> vector<16x128xf32>
    %92 = vector.broadcast %12 : vector<16x1xf32> to vector<16x128xf32>
    %93 = arith.addf %91, %92 : vector<16x128xf32>
    %94 = arith.addf %85, %93 : vector<16x128xf32>
    %cst_41 = arith.constant dense<0.000000e+00> : vector<128xf32>
    %95 = vector.multi_reduction <add>, %94, %cst_41 [0] : vector<16x128xf32> to vector<128xf32>
    %96 = vector.shape_cast %95 : vector<128xf32> to vector<1x128xf32>
    %cst_42 = arith.constant 1.600000e+01 : f32
    %97 = vector.broadcast %cst_42 : f32 to vector<1x128xf32>
    %98 = arith.divf %96, %97 : vector<1x128xf32>
    %99 = vector.broadcast %98 : vector<1x128xf32> to vector<16x128xf32>
    %100 = arith.subf %94, %99 : vector<16x128xf32>
    %101 = arith.mulf %100, %100 : vector<16x128xf32>
    %cst_43 = arith.constant dense<0.000000e+00> : vector<128xf32>
    %102 = vector.multi_reduction <add>, %101, %cst_43 [0] : vector<16x128xf32> to vector<128xf32>
    %103 = vector.shape_cast %102 : vector<128xf32> to vector<1x128xf32>
    %cst_44 = arith.constant 1.600000e+01 : f32
    %104 = vector.broadcast %cst_44 : f32 to vector<1x128xf32>
    %105 = arith.divf %103, %104 : vector<1x128xf32>
    %cst_45 = arith.constant 9.99999974E-6 : f32
    %106 = vector.broadcast %cst_45 : f32 to vector<1x128xf32>
    %107 = arith.addf %105, %106 : vector<1x128xf32>
    %108 = math.rsqrt %107 : vector<1x128xf32>
    %109 = vector.broadcast %108 : vector<1x128xf32> to vector<16x128xf32>
    %110 = arith.mulf %100, %109 : vector<16x128xf32>
    %111 = vector.broadcast %10 : vector<16x1xf32> to vector<16x128xf32>
    %112 = arith.mulf %110, %111 : vector<16x128xf32>
    %113 = vector.broadcast %11 : vector<16x1xf32> to vector<16x128xf32>
    %114 = arith.addf %112, %113 : vector<16x128xf32>
    %c0_46 = arith.constant 0 : index
    %c0_47 = arith.constant 0 : index
    %c0_48 = arith.constant 0 : index
    %115 = vector.load %arg5[%c0_46, %c0_47, %c0_48] : memref<1x16x128xf32, #tpu.memory_space<vmem>>, vector<1x16x128xf32>
    %116 = vector.shape_cast %115 : vector<1x16x128xf32> to vector<16x128xf32>
    %117 = vector.shape_cast %114 : vector<16x128xf32> to vector<1x16x128xf32>
    tpu.vector_store %arg5[%c0_46, %c0_47, %c0_48], %117 {strides = array<i32>} : memref<1x16x128xf32, #tpu.memory_space<vmem>>, vector<1x16x128xf32>,
    return
  }
  func.func @transform_0(%arg0: i32) -> (i32, i32, i32) {
    %c0_i32 = arith.constant 0 : i32
    %c0_i32_0 = arith.constant 0 : i32
    %c0_i32_1 = arith.constant 0 : i32
    return %arg0, %c0_i32, %c0_i32_0 : i32, i32, i32
  }
  func.func @transform_1(%arg0: i32) -> (i32, i32) {
    %c0_i32 = arith.constant 0 : i32
    %c0_i32_0 = arith.constant 0 : i32
    %c0_i32_1 = arith.constant 0 : i32
    return %c0_i32, %c0_i32_0 : i32, i32
  }
  func.func @transform_2(%arg0: i32) -> (i32, i32) {
    %c0_i32 = arith.constant 0 : i32
    %c0_i32_0 = arith.constant 0 : i32
    %c0_i32_1 = arith.constant 0 : i32
    return %c0_i32, %c0_i32_0 : i32, i32
  }
  func.func @transform_3(%arg0: i32) -> (i32, i32) {
    %c0_i32 = arith.constant 0 : i32
    %c0_i32_0 = arith.constant 0 : i32
    %c0_i32_1 = arith.constant 0 : i32
    return %c0_i32, %c0_i32_0 : i32, i32
  }
  func.func @transform_4(%arg0: i32) -> (i32, i32, i32) {
    %c0_i32 = arith.constant 0 : i32
    %c0_i32_0 = arith.constant 0 : i32
    %c0_i32_1 = arith.constant 0 : i32
    return %arg0, %c0_i32, %c0_i32_0 : i32, i32, i32
  }
}

</mosaic_0001>

<llo_original>
// kernel: tpu_custom_call.1
$region0: #{tpu_custom_call.1}
  #allocation0 [shape = 'u32[]', space=smem, size = 0x4, offset = 0x4, fixed_abs, tag = 'smem constant byte address 0x4 - core index']
  #allocation1 [shape = 'u32[144,128]{1,0:T(1,128)}', space=vmem, size = 0x12000, scoped, tag = 'internal scratch']
  %s0 = inlined_call_operand.vmem [shape: f32[2,16,128], index: 0, kind: input, shape index: {}]
  %s1 = inlined_call_operand.vmem [shape: f32[16,17], index: 1, kind: input, shape index: {}]
  %s2 = inlined_call_operand.vmem [shape: f32[64,17], index: 2, kind: input, shape index: {}]
  %s3 = inlined_call_operand.vmem [shape: f32[16,64], index: 3, kind: input, shape index: {}]
  %s4 = inlined_call_operand.hbm [shape: f32[2,16,128], index: 4, kind: output, shape index: {}]
  %s5 = sld [smem:[#allocation0]]
  $region49: #{tpu_custom_call.1} parent=0
    _
  %s7 = ssub.s32 1, %s5
  %s8 = scalar_select 0, %s7, %s5
  $region1: #{tpu_custom_call.1} parent=0
    #allocation2 [shape = 'u8[16384]{0}', space=vmem, size = 0x4000, scoped, tag = 'output window, operand 0']
    #allocation3 [shape = 's32[2]{0}', space=sflag, size = 0x8, scoped, tag = 'scoped memory for tpu_custom_call.1']
    %9 = vsyncpa [#allocation3], 0
    %s10 = scalar_lea.sflag [#allocation3], 1
    %11 = vsyncpa %s10, 0
    loop: start=0, step=1, limit=4
    $region2: #{tpu_custom_call.1} parent=1 // loop_pre_header
      _
    $region3: #{tpu_custom_call.1} parent=1 // loop_header
      %s13 = sphi 0, %s17
      %p14 = scmp.ge.s32.totalorder %s13, 4
      %s23 = sphi 0, %s25
      %s26 = sphi 0, %s23
      %s27 = sphi 0, %s26
      %s43 = sphi 0, %s27
      %s47 = sphi 0, %s47
      %s49 = sphi 0, %s47
      %s50 = sphi 0, %s49
      %s64 = sphi 0, %s50
      %s68 = sphi 0, %s68
      %s70 = sphi 0, %s68
      %s71 = sphi 0, %s70
      %s85 = sphi 0, %s71
      %s89 = sphi 0, %s89
      %s91 = sphi 0, %s89
      %s92 = sphi 0, %s91
      %s106 = sphi 0, %s92
      %s112 = sphi 0, %s114
      %s115 = sphi 0, %s112
      %s116 = sphi 0, %s115
      %s132 = sphi 0, %s116
    $region4: #{tpu_custom_call.1} parent=1 // loop_header_branch
      %16 = sbr.rel (%p14) target = $region8
    $region5: #{tpu_custom_call.1} parent=1 // loop_body
      %s18 = ssub.s32 %s13, 1
      %s19 = ssub.s32 %s13, 2
      %s20 = sadd.s32 %s13, 1
      %s21 = ssub.s32 %s13, %s20
      %p22 = scmp.eq.s32.totalorder %s21, 0
      %s24 = sadd.s32 %s23, 1
      %s25 = scalar_select %p22, %s23, %s24
      %p28 = pneg %p22
      %p29 = scmp.eq.s32.totalorder %s13, 1
      %p30 = por %p28, %p29
      %p31 = scmp.ne.s32.totalorder %s23, %s26
      %p32 = scmp.eq.s32.totalorder %s13, 0
      %p33 = por %p31, %p32
      %p34 = scmp.ne.s32.totalorder %s23, %s26
      %p35 = scmp.eq.s32.totalorder %s18, 1
      %p36 = por %p34, %p35
      %p37 = scmp.ne.s32.totalorder %s26, %s27
      %p38 = scmp.eq.s32.totalorder %s18, 0
      %p39 = por %p37, %p38
      %p40 = scmp.ne.s32.totalorder %s26, %s27
      %p41 = scmp.eq.s32.totalorder %s19, 1
      %p42 = por %p40, %p41
      %p44 = scmp.ne.s32.totalorder %s27, %s43
      %p45 = scmp.eq.s32.totalorder %s19, 0
      %p46 = por %p44, %p45
      %s48 = sadd.s32 %s47, 1
      %p51 = scmp.eq.s32.totalorder %s13, 1
      %p52 = scmp.ne.s32.totalorder %s47, %s49
      %p53 = scmp.eq.s32.totalorder %s13, 0
      %p54 = por %p52, %p53
      %p55 = scmp.ne.s32.totalorder %s47, %s49
      %p56 = scmp.eq.s32.totalorder %s18, 1
      %p57 = por %p55, %p56
      %p58 = scmp.ne.s32.totalorder %s49, %s50
      %p59 = scmp.eq.s32.totalorder %s18, 0
      %p60 = por %p58, %p59
      %p61 = scmp.ne.s32.totalorder %s49, %s50
      %p62 = scmp.eq.s32.totalorder %s19, 1
      %p63 = por %p61, %p62
      %p65 = scmp.ne.s32.totalorder %s50, %s64
      %p66 = scmp.eq.s32.totalorder %s19, 0
      %p67 = por %p65, %p66
      %s69 = sadd.s32 %s68, 1
      %p72 = scmp.eq.s32.totalorder %s13, 1
      %p73 = scmp.ne.s32.totalorder %s68, %s70
      %p74 = scmp.eq.s32.totalorder %s13, 0
      %p75 = por %p73, %p74
      %p76 = scmp.ne.s32.totalorder %s68, %s70
      %p77 = scmp.eq.s32.totalorder %s18, 1
      %p78 = por %p76, %p77
      %p79 = scmp.ne.s32.totalorder %s70, %s71
      %p80 = scmp.eq.s32.totalorder %s18, 0
      %p81 = por %p79, %p80
      %p82 = scmp.ne.s32.totalorder %s70, %s71
      %p83 = scmp.eq.s32.totalorder %s19, 1
      %p84 = por %p82, %p83
      %p86 = scmp.ne.s32.totalorder %s71, %s85
      %p87 = scmp.eq.s32.totalorder %s19, 0
      %p88 = por %p86, %p87
      %s90 = sadd.s32 %s89, 1
      %p93 = scmp.eq.s32.totalorder %s13, 1
      %p94 = scmp.ne.s32.totalorder %s89, %s91
      %p95 = scmp.eq.s32.totalorder %s13, 0
      %p96 = por %p94, %p95
      %p97 = scmp.ne.s32.totalorder %s89, %s91
      %p98 = scmp.eq.s32.totalorder %s18, 1
      %p99 = por %p97, %p98
      %p100 = scmp.ne.s32.totalorder %s91, %s92
      %p101 = scmp.eq.s32.totalorder %s18, 0
      %p102 = por %p100, %p101
      %p103 = scmp.ne.s32.totalorder %s91, %s92
      %p104 = scmp.eq.s32.totalorder %s19, 1
      %p105 = por %p103, %p104
      %p107 = scmp.ne.s32.totalorder %s92, %s106
      %p108 = scmp.eq.s32.totalorder %s19, 0
      %p109 = por %p107, %p108
      %s110 = ssub.s32 %s13, %s20
      %p111 = scmp.eq.s32.totalorder %s110, 0
      %s113 = sadd.s32 %s112, 1
      %s114 = scalar_select %p111, %s112, %s113
      %p117 = pneg %p111
      %p118 = scmp.eq.s32.totalorder %s13, 1
      %p119 = por %p117, %p118
      %p120 = scmp.ne.s32.totalorder %s112, %s115
      %p121 = scmp.eq.s32.totalorder %s13, 0
      %p122 = por %p120, %p121
      %p123 = scmp.ne.s32.totalorder %s112, %s115
      %p124 = scmp.eq.s32.totalorder %s18, 1
      %p125 = por %p123, %p124
      %p126 = scmp.ne.s32.totalorder %s115, %s116
      %p127 = scmp.eq.s32.totalorder %s18, 0
      %p128 = por %p126, %p127
      %p129 = scmp.ne.s32.totalorder %s115, %s116
      %p130 = scmp.eq.s32.totalorder %s19, 1
      %p131 = por %p129, %p130
      %p133 = scmp.ne.s32.totalorder %s116, %s132
      %p134 = scmp.eq.s32.totalorder %s19, 0
      %p135 = por %p133, %p134
      %p136 = scmp.le.s32.totalorder 1, %s13
      %p137 = scmp.lt.s32.totalorder %s13, 3
      %p138 = pnand %p136, %p137
      %p139 = pneg %p138
      // Predicated region
      $region9: #{tpu_custom_call.1} parent=5 // pred_check
        _
      $region10: #{tpu_custom_call.1} parent=5 // pred_check_branch
        %141 = sbr.rel (%p138) target = $region12
      $region11: #{tpu_custom_call.1} parent=5 // pred_region
        %s142 = ssub.s32 %s13, 1
        // Predicated region
        $region13: #{tpu_custom_call.1} parent=11 // pred_check
          %p143 = pneg %p60
        $region14: #{tpu_custom_call.1} parent=11 // pred_check_branch
          %145 = sbr.rel (%p143) target = $region16
        $region15: #{tpu_custom_call.1} parent=11 // pred_region
          _
        $region16: #{tpu_custom_call.1} parent=11 // pred_fallthru
          _
        // Predicated region
        $region17: #{tpu_custom_call.1} parent=11 // pred_check
          %p146 = pneg %p81
        $region18: #{tpu_custom_call.1} parent=11 // pred_check_branch
          %148 = sbr.rel (%p146) target = $region20
        $region19: #{tpu_custom_call.1} parent=11 // pred_region
          _
        $region20: #{tpu_custom_call.1} parent=11 // pred_fallthru
          _
        // Predicated region
        $region21: #{tpu_custom_call.1} parent=11 // pred_check
          %p149 = pneg %p102
        $region22: #{tpu_custom_call.1} parent=11 // pred_check_branch
          %151 = sbr.rel (%p149) target = $region24
        $region23: #{tpu_custom_call.1} parent=11 // pred_region
          _
        $region24: #{tpu_custom_call.1} parent=11 // pred_fallthru
          _
      $region12: #{tpu_custom_call.1} parent=5 // pred_fallthru
        _
      %p152 = scmp.lt.s32.totalorder %s13, 2
      // Predicated region
      $region25: #{tpu_custom_call.1} parent=5 // pred_check
        %p153 = pneg %p152
      $region26: #{tpu_custom_call.1} parent=5 // pred_check_branch
        %155 = sbr.rel (%p153) target = $region28
      $region27: #{tpu_custom_call.1} parent=5 // pred_region
        // Predicated region
        $region29: #{tpu_custom_call.1} parent=27 // pred_check
          %p156 = pneg %p33
        $region30: #{tpu_custom_call.1} parent=27 // pred_check_branch
          %158 = sbr.rel (%p156) target = $region32
        $region31: #{tpu_custom_call.1} parent=27 // pred_region
          %p159 = scmp.lt.s32.totalorder %s13, 1
          %s160 = scalar_select %p159, %s13, 1
          %s161 = smul.addr %s160, 2
          %s162 = smul.addr %s161, 8
          %s163 = scalar_lea.vmem %s0, %s162
        $region32: #{tpu_custom_call.1} parent=27 // pred_fallthru
          _
      $region28: #{tpu_custom_call.1} parent=5 // pred_fallthru
        _
      %p164 = scmp.le.s32.totalorder 1, %s13
      %p165 = scmp.lt.s32.totalorder %s13, 3
      %p166 = pnand %p164, %p165
      %p167 = pneg %p166
      // Predicated region
      $region33: #{tpu_custom_call.1} parent=5 // pred_check
        _
      $region34: #{tpu_custom_call.1} parent=5 // pred_check_branch
        %169 = sbr.rel (%p166) target = $region36
      $region35: #{tpu_custom_call.1} parent=5 // pred_region
        %s170 = ssub.s32 %s13, 1
        %p171 = scmp.lt.s32.totalorder %s18, 1
        %s172 = scalar_select %p171, %s18, 1
        %s173 = smul.addr %s172, 2
        %s174 = smul.addr %s173, 8
        %s175 = scalar_lea.vmem %s0, %s174
        %p176 = pneg %p39
        %p177 = pneg %p36
        %p178 = pneg %p60
        %p179 = pneg %p57
        %p180 = pneg %p81
        %p181 = pneg %p78
        %p182 = pneg %p102
        %p183 = pneg %p99
        %p184 = pneg %p128
        %p185 = pneg %p125
        %s186 = sand.u32 %s115, 1
        %s187 = scalar_lea.sflag [#allocation3], %s186
        %s188 = sand.u32 %s115, 1
        %s189 = smul.addr %s188, 16
        %s190 = scalar_lea.vmem [#allocation2], %s189
        %p191 = scmp.lt.s32.totalorder %s18, 1
        %s192 = scalar_select %p191, %s18, 1
        %s193 = smul.addr %s192, 2
        %s194 = smul.addr %s193, 8
        %s195 = scalar_lea.vmem %s0, %s194
        %v196 = vld [vmem:[%s1] sm:$0xff]
        %v197 = vld [vmem:[%s1 + $0x8] sm:$0xff]
        %v198 = vld [vmem:[%s1] sm:$0x1]
        %v199 = vld [vmem:[%s1] sm:$0x3]
        %v200 = vld [vmem:[%s2] sm:$0xff]
        %v201 = vld [vmem:[%s2 + $0x8] sm:$0xff]
        %v202 = vld [vmem:[%s2 + $0x10] sm:$0xff]
        %v203 = vld [vmem:[%s2 + $0x18] sm:$0xff]
        %v204 = vld [vmem:[%s2 + $0x20] sm:$0xff]
        %v205 = vld [vmem:[%s2 + $0x28] sm:$0xff]
        %v206 = vld [vmem:[%s2 + $0x30] sm:$0xff]
        %v207 = vld [vmem:[%s2 + $0x38] sm:$0xff]
        %v208 = vld [vmem:[%s3] sm:$0xff]
        %v209 = vld [vmem:[%s3 + $0x8] sm:$0xff]
        %v210 = vld [vmem:[%s195] sm:$0xff]
        %v211 = vld [vmem:[%s195 + $0x8] sm:$0xff]
        %v212 = vadd.f32 %v210, %v211
        %v213 = vrot.slane %v212, 4
        %v214 = vadd.f32 %v212, %v213
        %v215 = vrot.slane %v214, 2
        %v216 = vadd.f32 %v214, %v215
        %v217 = vrot.slane %v216, 1
        %v218 = vadd.f32 %v216, %v217
        %v219 = vrcp.pop 16.0
        %v220 = vmul.f32 %v218, %v219
        %222 = vset.pattern.permute.xlu0 8
        %223 = vperm.xlu0 %222, %v199
        %v224 = vpop.permute.xlu0 %223
        %v226 = vmul.f32 %v224, %v220
        %227 = vset.pattern.permute.xlu0 9
        %228 = vperm.xlu0 %227, %v199
        %v229 = vpop.permute.xlu0 %228
        %v231 = vadd.f32 %v226, %v229
        %v232 = vmax.f32 %v231, 0.0
        %234 = vset.pattern.permute.xlu0 10
        %235 = vperm.xlu0 %234, %v196
        %v236 = vpop.permute.xlu0 %235
        %239 = vset.pattern.permute.xlu0 10
        %240 = vperm.xlu0 %239, %v197
        %v241 = vpop.permute.xlu0 %240
        %vm243 = vcmask 15360
        %v244 = vsel %vm243, %v196, 0
        %v246 = vsel %vm243, %v197, 0
        %vm248 = vcmask 1041408
        %v250 = vsel %vm248, %v232, 0
        %252 = vmatprep.subr.mxu0 0.0
        %253 = vmatpush1.msra.mxu0 %v250
        %254 = vmatprep.subr.mxu0 0.0
        %255 = vmatpush1.msra.mxu0 0.0
        %256 = vmatprep.subr.mxu0 0.0
        %257 = vmatpush1.msra.mxu0 0.0
        %258 = vmatprep.subr.mxu0 0.0
        %259 = vmatpush1.msra.mxu0 0.0
        %260 = vmatprep.subr.mxu0 0.0
        %261 = vmatpush1.msra.mxu0 0.0
        %262 = vmatprep.subr.mxu0 0.0
        %263 = vmatpush1.msra.mxu0 0.0
        %264 = vmatprep.subr.mxu0 0.0
        %265 = vmatpush1.msra.mxu0 0.0
        %266 = vmatprep.subr.mxu0 0.0
        %267 = vmatpush1.msra.mxu0 0.0
        %268 = vmatprep.subr.mxu0 0.0
        %269 = vmatpush1.msra.mxu0 0.0
        %270 = vmatprep.subr.mxu0 0.0
        %271 = vmatpush1.msra.mxu0 0.0
        %272 = vmatprep.subr.mxu0 0.0
        %273 = vmatpush1.msra.mxu0 0.0
        %274 = vmatprep.subr.mxu0 0.0
        %275 = vmatpush1.msra.mxu0 0.0
        %276 = vmatprep.subr.mxu0 0.0
        %277 = vmatpush1.msra.mxu0 0.0
        %278 = vmatprep.subr.mxu0 0.0
        %279 = vmatpush1.msra.mxu0 0.0
        %280 = vmatprep.subr.mxu0 0.0
        %281 = vmatpush1.msra.mxu0 0.0
        %282 = vmatprep.subr.mxu0 0.0
        %283 = vmatpush1.msra.mxu0 0.0
        %284 = vmatprep.subr.mxu0 0.0
        %285 = vmatpush1.msra.mxu0 0.0
        %286 = vmatprep.subr.mxu0 0.0
        %287 = vmatpush1.msra.mxu0 0.0
        %288 = vmatprep.subr.mxu0 0.0
        %289 = vmatpush1.msra.mxu0 0.0
        %290 = vmatprep.subr.mxu0 0.0
        %291 = vmatpush1.msra.mxu0 0.0
        %292 = vmatprep.subr.mxu0 0.0
        %293 = vmatpush1.msra.mxu0 0.0
        %294 = vmatprep.subr.mxu0 0.0
        %295 = vmatpush1.msra.mxu0 0.0
        %296 = vmatprep.subr.mxu0 0.0
        %297 = vmatpush1.msra.mxu0 0.0
        %298 = vmatprep.subr.mxu0 0.0
        %299 = vmatpush1.msra.mxu0 0.0
        %300 = vmatprep.subr.mxu0 0.0
        %301 = vmatpush1.msra.mxu0 0.0
        %302 = vmatprep.subr.mxu0 0.0
        %303 = vmatpush1.msra.mxu0 0.0
        %304 = vmatprep.subr.mxu0 0.0
        %305 = vmatpush1.msra.mxu0 0.0
        %306 = vmatprep.subr.mxu0 0.0
        %307 = vmatpush1.msra.mxu0 0.0
        %308 = vmatprep.subr.mxu0 0.0
        %309 = vmatpush1.msra.mxu0 0.0
        %310 = vmatprep.subr.mxu0 0.0
        %311 = vmatpush1.msra.mxu0 0.0
        %312 = vmatprep.subr.mxu0 0.0
        %313 = vmatpush1.msra.mxu0 0.0
        %314 = vmatprep.subr.mxu0 0.0
        %315 = vmatpush1.msra.mxu0 0.0
        %316 = vmatprep.mubr.f32.mxu0 0.0
        %317 = vmatmul.mubr.f32.gmra.mrb[0].mxu0 %v244
        %v318 = vpop.f32.mrb[0].mxu0
        %v319 = vadd.f32 %v236, %v318
        %v320 = vpop.f32.mrb[0].mxu0
        %321 = vmatprep.mubr.f32.mxu0 0.0
        %322 = vmatmul.mubr.f32.gmra.mrb[0].mxu0 %v246
        %v323 = vpop.f32.mrb[0].mxu0
        %v324 = vadd.f32 %v241, %v323
        %v325 = vpop.f32.mrb[0].mxu0
        %326 = vdwg.mxu0
        %v327 = vxor.u32 %v319, 2147483648
        %v328 = vxor.u32 %v324, 2147483648
        %v329 = vmul.f32 %v327, 1.442695
        %v330 = vpow.pop %v329
        %v331 = vmul.f32 %v328, 1.442695
        %v332 = vpow.pop %v331
        %v333 = vadd.f32 %v330, 1.0
        %v334 = vadd.f32 %v332, 1.0
        %v335 = vrcp.pop %v333
        %v336 = vmul.f32 1.0, %v335
        %v337 = vrcp.pop %v334
        %v338 = vmul.f32 1.0, %v337
        %339 = vadd.xlane.f32.xlu0 %v210
        %v340 = vpop.xlane.xlu0 %339
        %341 = vadd.xlane.f32.xlu0 %v211
        %v342 = vpop.xlane.xlu0 %341
        %v343 = vrcp.pop 128.0
        %v344 = vmul.f32 %v340, %v343
        %v345 = vmul.f32 %v342, %v343
        %v346 = vmul.f32 %v196, %v344
        %v347 = vmul.f32 %v197, %v345
        %vm348 = vcmask 31760
        %v349 = vsel %vm348, %v346, 0.0
        %v350 = vsel %vm348, %v347, 0.0
        %v351 = vadd.f32 %v349, %v350
        %v352 = vrot.slane %v351, 4
        %v353 = vadd.f32 %v351, %v352
        %v354 = vrot.slane %v353, 2
        %v355 = vadd.f32 %v353, %v354
        %v356 = vrot.slane %v355, 1
        %v357 = vadd.f32 %v355, %v356
        %359 = vrot.lane.b32.xlu0 %v198, 126
        %v360 = vpop.permute.xlu0 %359
        %v362 = vadd.f32 %v357, %v360
        %v363 = vmax.f32 %v362, 0.0
        %365 = vrot.lane.b32.xlu0 %v363, 4
        %v366 = vpop.permute.xlu0 %365
        %v368 = vmul.f32 %v198, %v366
        %370 = vrot.lane.b32.xlu0 %v368, 122
        %v371 = vpop.permute.xlu0 %370
        %vm373 = vcmask 8192
        %v374 = vsel %vm373, %v371, 0.0
        %375 = vadd.xlane.f32.xlu0 %v374
        %v376 = vpop.xlane.xlu0 %375
        %v377 = vadd.f32 %v376, %v198
        %v378 = vxor.u32 %v377, 2147483648
        %v379 = vmul.f32 %v378, 1.442695
        %v380 = vpow.pop %v379
        %v381 = vadd.f32 %v380, 1.0
        %v382 = vrcp.pop %v381
        %v383 = vmul.f32 1.0, %v382
        %385 = vrot.lane.b32.xlu0 %v383, 117
        %v386 = vpop.permute.xlu0 %385
        %s387 = vtos %v386
        %v388 = vstv %s387
        %v390 = vadd.f32 %v336, %v388
        %v391 = vadd.f32 %v338, %v388
        %v392 = vxor.u32 %v390, 2147483648
        %v393 = vxor.u32 %v391, 2147483648
        %v394 = vmul.f32 %v392, 1.442695
        %v395 = vpow.pop %v394
        %v396 = vmul.f32 %v393, 1.442695
        %v397 = vpow.pop %v396
        %v398 = vadd.f32 %v395, 1.0
        %v399 = vadd.f32 %v397, 1.0
        %v400 = vrcp.pop %v398
        %v401 = vmul.f32 1.0, %v400
        %v402 = vrcp.pop %v399
        %v403 = vmul.f32 1.0, %v402
        %v404 = vmul.f32 %v210, %v401
        %v405 = vmul.f32 %v211, %v403
        %v406 = vadd.f32 %v210, %v404
        %v407 = vadd.f32 %v211, %v405
        %v408 = vadd.f32 %v406, %v407
        %v409 = vrot.slane %v408, 4
        %v410 = vadd.f32 %v408, %v409
        %v411 = vrot.slane %v410, 2
        %v412 = vadd.f32 %v410, %v411
        %v413 = vrot.slane %v412, 1
        %v414 = vadd.f32 %v412, %v413
        %v415 = vmul.f32 %v414, %v219
        %v416 = vsub.f32 %v406, %v415
        %v417 = vsub.f32 %v407, %v415
        %v418 = vmul.f32 %v416, %v416
        %v419 = vmul.f32 %v417, %v417
        %v420 = vadd.f32 %v418, %v419
        %v421 = vrot.slane %v420, 4
        %v422 = vadd.f32 %v420, %v421
        %v423 = vrot.slane %v422, 2
        %v424 = vadd.f32 %v422, %v423
        %v425 = vrot.slane %v424, 1
        %v426 = vadd.f32 %v424, %v425
        %v427 = vmul.f32 %v426, %v219
        %v428 = vadd.f32 %v427, 1e-05
        %v429 = vrsqrt.pop %v428
        %v430 = vmul.f32 %v416, %v429
        %v431 = vmul.f32 %v417, %v429
        %432 = vset.pattern.permute.xlu0 12
        %433 = vperm.xlu0 %432, %v196
        %v434 = vpop.permute.xlu0 %433
        %436 = vset.pattern.permute.xlu0 12
        %437 = vperm.xlu0 %436, %v197
        %v438 = vpop.permute.xlu0 %437
        %v440 = vmul.f32 %v430, %v434
        %v441 = vmul.f32 %v431, %v438
        %442 = vset.pattern.permute.xlu0 13
        %443 = vperm.xlu0 %442, %v196
        %v444 = vpop.permute.xlu0 %443
        %446 = vset.pattern.permute.xlu0 13
        %447 = vperm.xlu0 %446, %v197
        %v448 = vpop.permute.xlu0 %447
        %v450 = vadd.f32 %v440, %v444
        %v451 = vadd.f32 %v441, %v448
        %453 = vset.pattern.permute.xlu0 16
        %454 = vperm.xlu0 %453, %v200
        %v455 = vpop.permute.xlu0 %454
        %458 = vset.pattern.permute.xlu0 16
        %459 = vperm.xlu0 %458, %v201
        %v460 = vpop.permute.xlu0 %459
        %463 = vset.pattern.permute.xlu0 16
        %464 = vperm.xlu0 %463, %v202
        %v465 = vpop.permute.xlu0 %464
        %468 = vset.pattern.permute.xlu0 16
        %469 = vperm.xlu0 %468, %v203
        %v470 = vpop.permute.xlu0 %469
        %473 = vset.pattern.permute.xlu0 16
        %474 = vperm.xlu0 %473, %v204
        %v475 = vpop.permute.xlu0 %474
        %478 = vset.pattern.permute.xlu0 16
        %479 = vperm.xlu0 %478, %v205
        %v480 = vpop.permute.xlu0 %479
        %483 = vset.pattern.permute.xlu0 16
        %484 = vperm.xlu0 %483, %v206
        %v485 = vpop.permute.xlu0 %484
        %488 = vset.pattern.permute.xlu0 16
        %489 = vperm.xlu0 %488, %v207
        %v490 = vpop.permute.xlu0 %489
        %vm492 = vcmask 130048
        %v493 = vsel %vm492, %v200, 0
        %v495 = vsel %vm492, %v201, 0
        %v497 = vsel %vm492, %v202, 0
        %v499 = vsel %vm492, %v203, 0
        %v501 = vsel %vm492, %v204, 0
        %v503 = vsel %vm492, %v205, 0
        %v505 = vsel %vm492, %v206, 0
        %v507 = vsel %vm492, %v207, 0
        %509 = vmatprep.subr.mxu0 0.0
        %510 = vmatpush1.msra.mxu0 %v450
        %511 = vmatprep.subr.mxu0 0.0
        %512 = vmatpush1.msra.mxu0 %v451
        %513 = vmatprep.subr.mxu0 0.0
        %514 = vmatpush1.msra.mxu0 0.0
        %515 = vmatprep.subr.mxu0 0.0
        %516 = vmatpush1.msra.mxu0 0.0
        %517 = vmatprep.subr.mxu0 0.0
        %518 = vmatpush1.msra.mxu0 0.0
        %519 = vmatprep.subr.mxu0 0.0
        %520 = vmatpush1.msra.mxu0 0.0
        %521 = vmatprep.subr.mxu0 0.0
        %522 = vmatpush1.msra.mxu0 0.0
        %523 = vmatprep.subr.mxu0 0.0
        %524 = vmatpush1.msra.mxu0 0.0
        %525 = vmatprep.subr.mxu0 0.0
        %526 = vmatpush1.msra.mxu0 0.0
        %527 = vmatprep.subr.mxu0 0.0
        %528 = vmatpush1.msra.mxu0 0.0
        %529 = vmatprep.subr.mxu0 0.0
        %530 = vmatpush1.msra.mxu0 0.0
        %531 = vmatprep.subr.mxu0 0.0
        %532 = vmatpush1.msra.mxu0 0.0
        %533 = vmatprep.subr.mxu0 0.0
        %534 = vmatpush1.msra.mxu0 0.0
        %535 = vmatprep.subr.mxu0 0.0
        %536 = vmatpush1.msra.mxu0 0.0
        %537 = vmatprep.subr.mxu0 0.0
        %538 = vmatpush1.msra.mxu0 0.0
        %539 = vmatprep.subr.mxu0 0.0
        %540 = vmatpush1.msra.mxu0 0.0
        %541 = vmatprep.subr.mxu0 0.0
        %542 = vmatpush1.msra.mxu0 0.0
        %543 = vmatprep.subr.mxu0 0.0
        %544 = vmatpush1.msra.mxu0 0.0
        %545 = vmatprep.subr.mxu0 0.0
        %546 = vmatpush1.msra.mxu0 0.0
        %547 = vmatprep.subr.mxu0 0.0
        %548 = vmatpush1.msra.mxu0 0.0
        %549 = vmatprep.subr.mxu0 0.0
        %550 = vmatpush1.msra.mxu0 0.0
        %551 = vmatprep.subr.mxu0 0.0
        %552 = vmatpush1.msra.mxu0 0.0
        %553 = vmatprep.subr.mxu0 0.0
        %554 = vmatpush1.msra.mxu0 0.0
        %555 = vmatprep.subr.mxu0 0.0
        %556 = vmatpush1.msra.mxu0 0.0
        %557 = vmatprep.subr.mxu0 0.0
        %558 = vmatpush1.msra.mxu0 0.0
        %559 = vmatprep.subr.mxu0 0.0
        %560 = vmatpush1.msra.mxu0 0.0
        %561 = vmatprep.subr.mxu0 0.0
        %562 = vmatpush1.msra.mxu0 0.0
        %563 = vmatprep.subr.mxu0 0.0
        %564 = vmatpush1.msra.mxu0 0.0
        %565 = vmatprep.subr.mxu0 0.0
        %566 = vmatpush1.msra.mxu0 0.0
        %567 = vmatprep.subr.mxu0 0.0
        %568 = vmatpush1.msra.mxu0 0.0
        %569 = vmatprep.subr.mxu0 0.0
        %570 = vmatpush1.msra.mxu0 0.0
        %571 = vmatprep.subr.mxu0 0.0
        %572 = vmatpush1.msra.mxu0 0.0
        %573 = vmatprep.mubr.f32.mxu0 0.0
        %574 = vmatmul.mubr.f32.gmra.mrb[0].mxu0 %v493
        %v575 = vpop.f32.mrb[0].mxu0
        %v576 = vadd.f32 %v455, %v575
        %v577 = vpop.f32.mrb[0].mxu0
        %578 = vmatprep.mubr.f32.mxu0 0.0
        %579 = vmatmul.mubr.f32.gmra.mrb[0].mxu0 %v495
        %v580 = vpop.f32.mrb[0].mxu0
        %v581 = vadd.f32 %v460, %v580
        %v582 = vpop.f32.mrb[0].mxu0
        %583 = vmatprep.mubr.f32.mxu0 0.0
        %584 = vmatmul.mubr.f32.gmra.mrb[0].mxu0 %v497
        %v585 = vpop.f32.mrb[0].mxu0
        %v586 = vadd.f32 %v465, %v585
        %v587 = vpop.f32.mrb[0].mxu0
        %588 = vmatprep.mubr.f32.mxu0 0.0
        %589 = vmatmul.mubr.f32.gmra.mrb[0].mxu0 %v499
        %v590 = vpop.f32.mrb[0].mxu0
        %v591 = vadd.f32 %v470, %v590
        %v592 = vpop.f32.mrb[0].mxu0
        %593 = vmatprep.mubr.f32.mxu0 0.0
        %594 = vmatmul.mubr.f32.gmra.mrb[0].mxu0 %v501
        %v595 = vpop.f32.mrb[0].mxu0
        %v596 = vadd.f32 %v475, %v595
        %v597 = vpop.f32.mrb[0].mxu0
        %598 = vmatprep.mubr.f32.mxu0 0.0
        %599 = vmatmul.mubr.f32.gmra.mrb[0].mxu0 %v503
        %v600 = vpop.f32.mrb[0].mxu0
        %v601 = vadd.f32 %v480, %v600
        %v602 = vpop.f32.mrb[0].mxu0
        %603 = vmatprep.mubr.f32.mxu0 0.0
        %604 = vmatmul.mubr.f32.gmra.mrb[0].mxu0 %v505
        %v605 = vpop.f32.mrb[0].mxu0
        %v606 = vadd.f32 %v485, %v605
        %v607 = vpop.f32.mrb[0].mxu0
        %608 = vmatprep.mubr.f32.mxu0 0.0
        %609 = vmatmul.mubr.f32.gmra.mrb[0].mxu0 %v507
        %v610 = vpop.f32.mrb[0].mxu0
        %v611 = vadd.f32 %v490, %v610
        %v612 = vpop.f32.mrb[0].mxu0
        %613 = vdwg.mxu0
        %v614 = vmax.f32 %v576, 0.0
        %v615 = vmax.f32 %v581, 0.0
        %v616 = vmax.f32 %v586, 0.0
        %v617 = vmax.f32 %v591, 0.0
        %v618 = vmax.f32 %v596, 0.0
        %v619 = vmax.f32 %v601, 0.0
        %v620 = vmax.f32 %v606, 0.0
        %v621 = vmax.f32 %v611, 0.0
        %622 = vset.pattern.permute.xlu0 16
        %623 = vperm.xlu0 %622, %v196
        %v624 = vpop.permute.xlu0 %623
        %626 = vset.pattern.permute.xlu0 16
        %627 = vperm.xlu0 %626, %v197
        %v628 = vpop.permute.xlu0 %627
        %vm630 = vcmask 523264
        %v632 = vsel %vm630, %v208, 0
        %v635 = vsel %vm630, %v209, 0
        %637 = vmatprep.subr.mxu0 0.0
        %638 = vmatpush1.msra.mxu0 %v614
        %639 = vmatprep.subr.mxu0 0.0
        %640 = vmatpush1.msra.mxu0 %v615
        %641 = vmatprep.subr.mxu0 0.0
        %642 = vmatpush1.msra.mxu0 %v616
        %643 = vmatprep.subr.mxu0 0.0
        %644 = vmatpush1.msra.mxu0 %v617
        %645 = vmatprep.subr.mxu0 0.0
        %646 = vmatpush1.msra.mxu0 %v618
        %647 = vmatprep.subr.mxu0 0.0
        %648 = vmatpush1.msra.mxu0 %v619
        %649 = vmatprep.subr.mxu0 0.0
        %650 = vmatpush1.msra.mxu0 %v620
        %651 = vmatprep.subr.mxu0 0.0
        %652 = vmatpush1.msra.mxu0 %v621
        %653 = vmatprep.subr.mxu0 0.0
        %654 = vmatpush1.msra.mxu0 0.0
        %655 = vmatprep.subr.mxu0 0.0
        %656 = vmatpush1.msra.mxu0 0.0
        %657 = vmatprep.subr.mxu0 0.0
        %658 = vmatpush1.msra.mxu0 0.0
        %659 = vmatprep.subr.mxu0 0.0
        %660 = vmatpush1.msra.mxu0 0.0
        %661 = vmatprep.subr.mxu0 0.0
        %662 = vmatpush1.msra.mxu0 0.0
        %663 = vmatprep.subr.mxu0 0.0
        %664 = vmatpush1.msra.mxu0 0.0
        %665 = vmatprep.subr.mxu0 0.0
        %666 = vmatpush1.msra.mxu0 0.0
        %667 = vmatprep.subr.mxu0 0.0
        %668 = vmatpush1.msra.mxu0 0.0
        %669 = vmatprep.subr.mxu0 0.0
        %670 = vmatpush1.msra.mxu0 0.0
        %671 = vmatprep.subr.mxu0 0.0
        %672 = vmatpush1.msra.mxu0 0.0
        %673 = vmatprep.subr.mxu0 0.0
        %674 = vmatpush1.msra.mxu0 0.0
        %675 = vmatprep.subr.mxu0 0.0
        %676 = vmatpush1.msra.mxu0 0.0
        %677 = vmatprep.subr.mxu0 0.0
        %678 = vmatpush1.msra.mxu0 0.0
        %679 = vmatprep.subr.mxu0 0.0
        %680 = vmatpush1.msra.mxu0 0.0
        %681 = vmatprep.subr.mxu0 0.0
        %682 = vmatpush1.msra.mxu0 0.0
        %683 = vmatprep.subr.mxu0 0.0
        %684 = vmatpush1.msra.mxu0 0.0
        %685 = vmatprep.subr.mxu0 0.0
        %686 = vmatpush1.msra.mxu0 0.0
        %687 = vmatprep.subr.mxu0 0.0
        %688 = vmatpush1.msra.mxu0 0.0
        %689 = vmatprep.subr.mxu0 0.0
        %690 = vmatpush1.msra.mxu0 0.0
        %691 = vmatprep.subr.mxu0 0.0
        %692 = vmatpush1.msra.mxu0 0.0
        %693 = vmatprep.subr.mxu0 0.0
        %694 = vmatpush1.msra.mxu0 0.0
        %695 = vmatprep.subr.mxu0 0.0
        %696 = vmatpush1.msra.mxu0 0.0
        %697 = vmatprep.subr.mxu0 0.0
        %698 = vmatpush1.msra.mxu0 0.0
        %699 = vmatprep.subr.mxu0 0.0
        %700 = vmatpush1.msra.mxu0 0.0
        %701 = vmatprep.mubr.f32.mxu0 0.0
        %702 = vmatmul.mubr.f32.gmra.mrb[0].mxu0 %v632
        %v703 = vpop.f32.mrb[0].mxu0
        %v704 = vadd.f32 %v624, %v703
        %v705 = vpop.f32.mrb[0].mxu0
        %706 = vmatprep.mubr.f32.mxu0 0.0
        %707 = vmatmul.mubr.f32.gmra.mrb[0].mxu0 %v635
        %v708 = vpop.f32.mrb[0].mxu0
        %v709 = vadd.f32 %v628, %v708
        %v710 = vpop.f32.mrb[0].mxu0
        %711 = vdwg.mxu0
        %v712 = vadd.f32 %v450, %v704
        %v713 = vadd.f32 %v451, %v709
        %v714 = vadd.f32 %v712, %v713
        %v715 = vrot.slane %v714, 4
        %v716 = vadd.f32 %v714, %v715
        %v717 = vrot.slane %v716, 2
        %v718 = vadd.f32 %v716, %v717
        %v719 = vrot.slane %v718, 1
        %v720 = vadd.f32 %v718, %v719
        %v721 = vmul.f32 %v720, %v219
        %v722 = vsub.f32 %v712, %v721
        %v723 = vsub.f32 %v713, %v721
        %v724 = vmul.f32 %v722, %v722
        %v725 = vmul.f32 %v723, %v723
        %v726 = vadd.f32 %v724, %v725
        %v727 = vrot.slane %v726, 4
        %v728 = vadd.f32 %v726, %v727
        %v729 = vrot.slane %v728, 2
        %v730 = vadd.f32 %v728, %v729
        %v731 = vrot.slane %v730, 1
        %v732 = vadd.f32 %v730, %v731
        %v733 = vmul.f32 %v732, %v219
        %v734 = vadd.f32 %v733, 1e-05
        %v735 = vrsqrt.pop %v734
        %v736 = vmul.f32 %v722, %v735
        %v737 = vmul.f32 %v723, %v735
        %738 = vset.pattern.permute.xlu0 14
        %739 = vperm.xlu0 %738, %v196
        %v740 = vpop.permute.xlu0 %739
        %742 = vset.pattern.permute.xlu0 14
        %743 = vperm.xlu0 %742, %v197
        %v744 = vpop.permute.xlu0 %743
        %v746 = vmul.f32 %v736, %v740
        %v747 = vmul.f32 %v737, %v744
        %748 = vset.pattern.permute.xlu0 15
        %749 = vperm.xlu0 %748, %v196
        %v750 = vpop.permute.xlu0 %749
        %752 = vset.pattern.permute.xlu0 15
        %753 = vperm.xlu0 %752, %v197
        %v754 = vpop.permute.xlu0 %753
        %v756 = vadd.f32 %v746, %v750
        %v757 = vadd.f32 %v747, %v754
        %758 = vst [vmem:[%s190] sm:$0xff] %v756
        %759 = vst [vmem:[%s190 + $0x8] sm:$0xff] %v757
        %s760 = sand.u32 %s115, 1
        %s761 = scalar_lea.sflag [#allocation3], %s760
        %s762 = sand.u32 %s115, 1
        %s763 = smul.addr %s762, 16
        %s764 = scalar_lea.vmem [#allocation2], %s763
        // Predicated region
        $region37: #{tpu_custom_call.1} parent=35 // pred_check
          %p765 = pneg %p125
        $region38: #{tpu_custom_call.1} parent=35 // pred_check_branch
          %767 = sbr.rel (%p765) target = $region40
        $region39: #{tpu_custom_call.1} parent=35 // pred_region
          %s769 = ssub.s32 256, 256
          %770 = vsyncadd %s761, %s769
          %s771 = smul.addr %s18, 2
          %s772 = smul.addr %s771, 128
          %s773 = scalar_lea.hbm %s4, %s772
          %s774 = sshll.u32 %s764, 4
          %s775 = int_to_ptr.vmem [resolvable:$true] %s774
          %780 = dma.vmem_to_hbm [thread:$0]  %s775, 256, %s773, %s761, 128, 128, 8
        $region40: #{tpu_custom_call.1} parent=35 // pred_fallthru
          _
      $region36: #{tpu_custom_call.1} parent=5 // pred_fallthru
        _
      %p781 = scmp.le.s32.totalorder 2, %s13
      // Predicated region
      $region41: #{tpu_custom_call.1} parent=5 // pred_check
        %p782 = pneg %p781
      $region42: #{tpu_custom_call.1} parent=5 // pred_check_branch
        %784 = sbr.rel (%p782) target = $region44
      $region43: #{tpu_custom_call.1} parent=5 // pred_region
        %s785 = ssub.s32 %s13, 2
        // Predicated region
        $region45: #{tpu_custom_call.1} parent=43 // pred_check
          %p786 = pneg %p131
        $region46: #{tpu_custom_call.1} parent=43 // pred_check_branch
          %788 = sbr.rel (%p786) target = $region48
        $region47: #{tpu_custom_call.1} parent=43 // pred_region
          %s789 = sand.u32 %s116, 1
          %s790 = scalar_lea.sflag [#allocation3], %s789
          %s791 = sand.u32 %s116, 1
          %s792 = smul.addr %s791, 16
          %s793 = scalar_lea.vmem [#allocation2], %s792
          %794 = dma.done %s790, 256
        $region48: #{tpu_custom_call.1} parent=43 // pred_fallthru
          _
      $region44: #{tpu_custom_call.1} parent=5 // pred_fallthru
        _
    $region6: #{tpu_custom_call.1} parent=1 // loop_footer
      %s17 = sadd.s32 1, %s13
    $region7: #{tpu_custom_call.1} parent=1 // loop_footer_branch
      %12 = sbr.rel target = $region3
    $region8: #{tpu_custom_call.1} parent=1 // loop_exit
      _
    %795 = vsyncpa [#allocation3], 1
    %s796 = scalar_lea.sflag [#allocation3], 1
    %797 = vsyncpa %s796, 1

</llo_original>
